<compile_context>
chip_gen: v7x
topology: tpu7x:2x2x1
jax: 0.10.0
libtpu: 0.0.40
codegen_flags: <defaults>
</compile_context>

<pallas_src>
import numpy as np
import jax
import jax.numpy as jnp
from jax.experimental import pallas as pl
from jax.experimental.pallas import tpu as pltpu

# ---- small, module-consistent hyperparameters -------------------------------
EMB_DIM = 32                 # emb_dim
N_VOCAB = 50                 # n_vocab
H_DIM = 30                   # h_dim  -> n_filter = h_dim // 3
N_FILTER = H_DIM // 3        # 10
TOP_DIM = 16                 # top_dim
B = 2                        # batch
S = 8                        # sequence length (>= 5 so conv5 is valid)
FEAT_DIM = 3 * N_FILTER + TOP_DIM   # == self.h_dim in the torch module (46)

KMAX = 5                     # widest conv kernel
LANE = 128                   # TPU lane width; each conv tap gets one lane tile
BT = 2                       # sequences per grid step (== B for the demo)

assert S & (S - 1) == 0, "kernel uses a bitwise-and for (row mod S)"
assert B % BT == 0


# ---- Pallas kernel -----------------------------------------------------------
def cnn_kernel(tok_ref, top_ref, tab_ref, const_ref, out_ref):
    """One grid step = BT sequences; everything lives in VMEM."""
    F = N_FILTER
    ROWS = BT * S

    # --- fused embedding-gather + all-conv matmul (bf16 MXU, f32 accumulate) --
    tok = tok_ref[...]                                          # (ROWS, 1) int32
    vocab_iota = jax.lax.broadcasted_iota(jnp.int32, (ROWS, N_VOCAB), 1)
    onehot = (vocab_iota == tok).astype(jnp.bfloat16)           # exact in bf16
    c = jnp.dot(onehot, tab_ref[...],
                preferred_element_type=jnp.float32)             # (ROWS, 5*128) f32

    # --- per-tap combine: acc[t, f] = sum_j c[t + j, j*128 + f] ---------------
    # Sublane roll by (ROWS - j) == shift of -j.  Rows that wrap across a
    # sequence boundary hit either a zero-padded tap block (conv3/conv4 taps
    # beyond their width) or a window zero-masked after ReLU below.
    acc = c[:, 0:LANE]
    for j in range(1, KMAX):
        acc = acc + pltpu.roll(c[:, j * LANE:(j + 1) * LANE], ROWS - j, 0)

    # --- constants: one (8,128) tile, sublane-row selects ---------------------
    conv_bias = const_ref[0:1, :]                               # (1, 128)
    fc_conv = const_ref[1:2, :]                                 # (1, 128)
    fc_top = const_ref[2:3, :]                                  # (1, 128), lane TOP_DIM holds b

    # --- fused bias + ReLU + invalid-window mask (single select) --------------
    pre = acc + conv_bias                                       # (ROWS, 128)
    r_iota = jax.lax.broadcasted_iota(jnp.int32, (ROWS, LANE), 0)
    t_iota = jnp.bitwise_and(r_iota, S - 1)                     # position within sequence
    f_iota = jax.lax.broadcasted_iota(jnp.int32, (ROWS, LANE), 1)
    max_t = jnp.where(f_iota < F, S - 3,
            jnp.where(f_iota < 2 * F, S - 4,
            jnp.where(f_iota < 3 * F, S - 5, -1)))              # lanes >= 3F never valid
    act = jnp.where((t_iota <= max_t) & (pre > 0.0), pre, 0.0)  # relu(x) >= 0 so 0-mask is exact

    # --- per-sequence max-pool over time (8-aligned sublane blocks, S == 8) ---
    pooled = jnp.concatenate(
        [jnp.max(act[b * S:(b + 1) * S, :], axis=0, keepdims=True)
         for b in range(BT)], axis=0)                           # (BT, 128)

    # --- fc epilogue on VPU/XLU; output bias rides on the constant-1 top lane -
    out = (jnp.sum(pooled * fc_conv, axis=-1, keepdims=True)
           + jnp.sum(top_ref[...] * fc_top, axis=-1, keepdims=True))
    out_ref[...] = out                                          # (BT, 1) full store


# ---- host-side packing of the module parameters -----------------------------
def pack_params(params):
    D, F = EMB_DIM, N_FILTER
    # zero-padded conv weight slab: conv3 | conv4 | conv5 along the filter axis
    wp = jnp.zeros((KMAX * D, 3 * F), jnp.float32)
    wp = wp.at[0:3 * D, 0:F].set(params["w3"])
    wp = wp.at[0:4 * D, F:2 * F].set(params["w4"])
    wp = wp.at[0:5 * D, 2 * F:3 * F].set(params["w5"])

    # algebraic fold: per-tap (V, 3F) tables, each in its own 128-lane block
    tab = jnp.zeros((N_VOCAB, KMAX * LANE), jnp.float32)
    for j in range(KMAX):
        tap = params["emb"].astype(jnp.float32) @ wp[j * D:(j + 1) * D, :]
        tab = tab.at[:, j * LANE:j * LANE + 3 * F].set(tap)
    tab = tab.astype(jnp.bfloat16)                              # bf16 MXU operand

    # one (8,128) constant tile: row0 = conv biases, row1 = fc (conv part),
    # row2 = fc (top part) with the output bias b folded into lane TOP_DIM.
    const = jnp.zeros((8, LANE), jnp.float32)
    const = const.at[0, 0:F].set(params["b3"][0])
    const = const.at[0, F:2 * F].set(params["b4"][0])
    const = const.at[0, 2 * F:3 * F].set(params["b5"][0])
    const = const.at[1, 0:3 * F].set(params["fc"][0:3 * F, 0])
    const = const.at[2, 0:TOP_DIM].set(params["fc"][3 * F:, 0])
    const = const.at[2, TOP_DIM].set(params["b"][0, 0])
    return tab, const


# ---- wrapper ------------------------------------------------------------------
def cnn_forward(tokens, top, params):
    Bsz, Ssz = tokens.shape
    assert Ssz == S and Bsz % BT == 0
    tab, const = pack_params(params)

    tok2 = tokens.reshape(Bsz * S, 1).astype(jnp.int32)
    top_pad = jnp.zeros((Bsz, LANE), jnp.float32)
    top_pad = top_pad.at[:, 0:TOP_DIM].set(top.astype(jnp.float32))
    top_pad = top_pad.at[:, TOP_DIM].set(1.0)                   # bias lane (pairs with const row 2)

    flops = 2 * Bsz * S * N_VOCAB * KMAX * LANE + 8 * Bsz * S * LANE
    bytes_accessed = (4 * tok2.size + 4 * top_pad.size + 2 * tab.size
                      + 4 * const.size + 4 * Bsz)

    out = pl.pallas_call(
        cnn_kernel,
        out_shape=jax.ShapeDtypeStruct((Bsz, 1), jnp.float32),
        grid=(Bsz // BT,),
        in_specs=[
            pl.BlockSpec((BT * S, 1), lambda i: (i, 0)),          # tokens for this tile
            pl.BlockSpec((BT, LANE), lambda i: (i, 0)),           # padded top features
            pl.BlockSpec((N_VOCAB, KMAX * LANE), lambda i: (0, 0)),  # folded emb*conv table
            pl.BlockSpec((8, LANE), lambda i: (0, 0)),            # packed constants
        ],
        out_specs=pl.BlockSpec((BT, 1), lambda i: (i, 0)),
        compiler_params=pltpu.CompilerParams(
            dimension_semantics=("parallel",)),
        cost_estimate=pl.CostEstimate(flops=flops, transcendentals=0,
                                      bytes_accessed=bytes_accessed),
    )(tok2, top_pad, tab, const)
    return out[:, 0]   # matches torch `.squeeze()` -> (Bsz,)


# ---- pure-JAX reference ------------------------------------------------------
def cnn_reference(tokens, top, params):
    emb = jnp.take(params["emb"], tokens, axis=0).astype(jnp.float32)  # (B, S, D)

    def branch(w, bvec, k):
        nwin = S - k + 1
        acc = jnp.zeros((B, nwin, N_FILTER), jnp.float32)
        for j in range(k):
            acc = acc + jnp.einsum("bsd,df->bsf",
                                   emb[:, j:j + nwin, :],
                                   w[j * EMB_DIM:(j + 1) * EMB_DIM, :])
        acc = jax.nn.relu(acc + bvec)          # (1, F) broadcasts
        return jnp.max(acc, axis=1)            # (B, F)

    x3 = branch(params["w3"], params["b3"], 3)
    x4 = branch(params["w4"], params["b4"], 4)
    x5 = branch(params["w5"], params["b5"], 5)
    feat = jnp.concatenate([x3, x4, x5, top], axis=-1)     # (B, FEAT_DIM)
    return (feat @ params["fc"] + params["b"])[:, 0]


# ---- deterministic parameter init (synthetic, shapes from __init__) ----------
def init_params(key):
    ks = jax.random.split(key, 9)
    emb = jax.random.normal(ks[0], (N_VOCAB, EMB_DIM), jnp.float32)
    emb = emb.at[0].set(0.0)                                # padding_idx = 0

    def conv_w(k_, kk):
        # torch Conv2d weight (F, 1, kk, D) laid out as (kk*D, F) for the matmul
        scale = 1.0 / np.sqrt(kk * EMB_DIM)
        return jax.random.normal(k_, (kk * EMB_DIM, N_FILTER), jnp.float32) * scale

    params = {
        "emb": emb,
        "w3": conv_w(ks[1], 3),
        "b3": jax.random.normal(ks[2], (1, N_FILTER), jnp.float32) * 0.1,
        "w4": conv_w(ks[3], 4),
        "b4": jax.random.normal(ks[4], (1, N_FILTER), jnp.float32) * 0.1,
        "w5": conv_w(ks[5], 5),
        "b5": jax.random.normal(ks[6], (1, N_FILTER), jnp.float32) * 0.1,
        # xavier-ish init for fc (FEAT_DIM, 1); bias b = [0]
        "fc": jax.random.normal(ks[7], (FEAT_DIM, 1), jnp.float32)
              * np.sqrt(2.0 / (FEAT_DIM + 1)),
        "b": jnp.zeros((1, 1), jnp.float32),
    }
    return params


if __name__ == "__main__":
    key = jax.random.PRNGKey(0)
    k_tok, k_top, k_par = jax.random.split(key, 3)

    tokens = jax.random.randint(k_tok, (B, S), 0, N_VOCAB, dtype=jnp.int32)
    tokens = tokens.at[:, -1].set(0)          # exercise the padding_idx row
    top = jax.random.normal(k_top, (B, TOP_DIM), jnp.float32)
    params = init_params(k_par)

    out = cnn_forward(tokens, top, params)
    out = jax.block_until_ready(out)

    ref = jax.block_until_ready(cnn_reference(tokens, top, params))
    assert out.shape == (B,), out.shape
    np.testing.assert_allclose(np.asarray(out), np.asarray(ref), rtol=5e-2, atol=5e-2)

    print("KERNEL_OK")
</pallas_src>

<mosaic_0001>
module attributes {stable_mosaic.version = 11 : i64} {
  func.func @cnn_kernel(%arg0: i32, %arg1: memref<16x1xi32, #tpu.memory_space<vmem>>, %arg2: memref<2x128xf32, #tpu.memory_space<vmem>>, %arg3: memref<50x640xbf16, #tpu.memory_space<vmem>>, %arg4: memref<8x128xf32, #tpu.memory_space<vmem>>, %arg5: memref<2x1xf32, #tpu.memory_space<vmem>>) attributes {dimension_semantics = [#tpu.dimension_semantics<parallel>], iteration_bounds = array<i64: 1>, scalar_prefetch = 0 : i64, scratch_operands = 0 : i64, tpu.core_type = #tpu.core_type<tc>, window_params = [{transform_indices = @transform_0, window_bounds = array<i64: 16, 1>}, {transform_indices = @transform_1, window_bounds = array<i64: 2, 128>}, {pipeline_mode = #tpu.pipeline_mode<synchronous>, transform_indices = @transform_2, window_bounds = array<i64: 50, 640>}, {pipeline_mode = #tpu.pipeline_mode<synchronous>, transform_indices = @transform_3, window_bounds = array<i64: 8, 128>}, {transform_indices = @transform_4, window_bounds = array<i64: 2, 1>}]} {
    %c0 = arith.constant 0 : index
    %c0_0 = arith.constant 0 : index
    %0 = vector.load %arg1[%c0, %c0_0] : memref<16x1xi32, #tpu.memory_space<vmem>>, vector<16x1xi32>
    %1 = tpu.iota {dimensions = array<i32: 1>} : vector<16x50xi32>
    %2 = vector.broadcast %0 : vector<16x1xi32> to vector<16x50xi32>
    %3 = arith.cmpi eq, %1, %2 : vector<16x50xi32>
    %4 = arith.extui %3 : vector<16x50xi1> to vector<16x50xi32>
    %5 = arith.sitofp %4 : vector<16x50xi32> to vector<16x50xf32>
    %6 = arith.truncf %5 : vector<16x50xf32> to vector<16x50xbf16>
    %c0_1 = arith.constant 0 : index
    %c0_2 = arith.constant 0 : index
    %7 = vector.load %arg3[%c0_1, %c0_2] : memref<50x640xbf16, #tpu.memory_space<vmem>>, vector<50x640xbf16>
    %cst = arith.constant dense<0.000000e+00> : vector<16x640xf32>
    %8 = tpu.matmul %6, %7, %cst {dimension_numbers = #tpu.dot_dimension_numbers<[1], [0], [0], [1], [0, 0, 1, 1], [], []>} : vector<16x50xbf16>, vector<50x640xbf16>, vector<16x640xf32> -> vector<16x640xf32>
    %9 = vector.extract_strided_slice %8 {offsets = [0, 0], sizes = [16, 128], strides = [1, 1]} : vector<16x640xf32> to vector<16x128xf32>
    %10 = vector.extract_strided_slice %8 {offsets = [0, 128], sizes = [16, 128], strides = [1, 1]} : vector<16x640xf32> to vector<16x128xf32>
    %c15_i32 = arith.constant 15 : i32
    %11 = tpu.dynamic_rotate %10 by %c15_i32 dim 0 : vector<16x128xf32>, i32 -> vector<16x128xf32>
    %12 = arith.addf %9, %11 : vector<16x128xf32>
    %13 = vector.extract_strided_slice %8 {offsets = [0, 256], sizes = [16, 128], strides = [1, 1]} : vector<16x640xf32> to vector<16x128xf32>
    %c14_i32 = arith.constant 14 : i32
    %14 = tpu.dynamic_rotate %13 by %c14_i32 dim 0 : vector<16x128xf32>, i32 -> vector<16x128xf32>
    %15 = arith.addf %12, %14 : vector<16x128xf32>
    %16 = vector.extract_strided_slice %8 {offsets = [0, 384], sizes = [16, 128], strides = [1, 1]} : vector<16x640xf32> to vector<16x128xf32>
    %c13_i32 = arith.constant 13 : i32
    %17 = tpu.dynamic_rotate %16 by %c13_i32 dim 0 : vector<16x128xf32>, i32 -> vector<16x128xf32>
    %18 = arith.addf %15, %17 : vector<16x128xf32>
    %19 = vector.extract_strided_slice %8 {offsets = [0, 512], sizes = [16, 128], strides = [1, 1]} : vector<16x640xf32> to vector<16x128xf32>
    %c12_i32 = arith.constant 12 : i32
    %20 = tpu.dynamic_rotate %19 by %c12_i32 dim 0 : vector<16x128xf32>, i32 -> vector<16x128xf32>
    %21 = arith.addf %18, %20 : vector<16x128xf32>
    %c0_3 = arith.constant 0 : index
    %c0_4 = arith.constant 0 : index
    %22 = vector.load %arg4[%c0_3, %c0_4] : memref<8x128xf32, #tpu.memory_space<vmem>>, vector<1x128xf32>
    %c1 = arith.constant 1 : index
    %c0_5 = arith.constant 0 : index
    %23 = vector.load %arg4[%c1, %c0_5] : memref<8x128xf32, #tpu.memory_space<vmem>>, vector<1x128xf32>
    %c2 = arith.constant 2 : index
    %c0_6 = arith.constant 0 : index
    %24 = vector.load %arg4[%c2, %c0_6] : memref<8x128xf32, #tpu.memory_space<vmem>>, vector<1x128xf32>
    %25 = vector.broadcast %22 : vector<1x128xf32> to vector<16x128xf32>
    %26 = arith.addf %21, %25 : vector<16x128xf32>
    %27 = tpu.iota {dimensions = array<i32: 0>} : vector<16x128xi32>
    %c7_i32 = arith.constant 7 : i32
    %28 = vector.broadcast %c7_i32 : i32 to vector<16x128xi32>
    %29 = arith.andi %27, %28 : vector<16x128xi32>
    %30 = tpu.iota {dimensions = array<i32: 1>} : vector<16x128xi32>
    %c10_i32 = arith.constant 10 : i32
    %31 = vector.broadcast %c10_i32 : i32 to vector<16x128xi32>
    %32 = arith.cmpi slt, %30, %31 : vector<16x128xi32>
    %c20_i32 = arith.constant 20 : i32
    %33 = vector.broadcast %c20_i32 : i32 to vector<16x128xi32>
    %34 = arith.cmpi slt, %30, %33 : vector<16x128xi32>
    %c30_i32 = arith.constant 30 : i32
    %35 = vector.broadcast %c30_i32 : i32 to vector<16x128xi32>
    %36 = arith.cmpi slt, %30, %35 : vector<16x128xi32>
    %c3_i32 = arith.constant 3 : i32
    %c-1_i32 = arith.constant -1 : i32
    %37 = vector.broadcast %c3_i32 : i32 to vector<16x128xi32>
    %38 = vector.broadcast %c-1_i32 : i32 to vector<16x128xi32>
    %39 = arith.select %36, %37, %38 : vector<16x128xi1>, vector<16x128xi32>
    %c4_i32 = arith.constant 4 : i32
    %40 = vector.broadcast %c4_i32 : i32 to vector<16x128xi32>
    %41 = arith.select %34, %40, %39 : vector<16x128xi1>, vector<16x128xi32>
    %c5_i32 = arith.constant 5 : i32
    %42 = vector.broadcast %c5_i32 : i32 to vector<16x128xi32>
    %43 = arith.select %32, %42, %41 : vector<16x128xi1>, vector<16x128xi32>
    %44 = arith.cmpi sle, %29, %43 : vector<16x128xi32>
    %cst_7 = arith.constant 0.000000e+00 : f32
    %45 = vector.broadcast %cst_7 : f32 to vector<16x128xf32>
    %46 = arith.cmpf ogt, %26, %45 : vector<16x128xf32>
    %47 = arith.andi %44, %46 : vector<16x128xi1>
    %cst_8 = arith.constant 0.000000e+00 : f32
    %48 = vector.broadcast %cst_8 : f32 to vector<16x128xf32>
    %49 = arith.select %47, %26, %48 : vector<16x128xi1>, vector<16x128xf32>
    %50 = vector.extract_strided_slice %49 {offsets = [0, 0], sizes = [8, 128], strides = [1, 1]} : vector<16x128xf32> to vector<8x128xf32>
    %cst_9 = arith.constant dense<0xFF800000> : vector<128xf32>
    %51 = vector.multi_reduction <maximumf>, %50, %cst_9 [0] : vector<8x128xf32> to vector<128xf32>
    %52 = vector.shape_cast %51 : vector<128xf32> to vector<1x128xf32>
    %53 = vector.extract_strided_slice %49 {offsets = [8, 0], sizes = [8, 128], strides = [1, 1]} : vector<16x128xf32> to vector<8x128xf32>
    %cst_10 = arith.constant dense<0xFF800000> : vector<128xf32>
    %54 = vector.multi_reduction <maximumf>, %53, %cst_10 [0] : vector<8x128xf32> to vector<128xf32>
    %55 = vector.shape_cast %54 : vector<128xf32> to vector<1x128xf32>
    %56 = tpu.concatenate %52, %55 in 0 : vector<1x128xf32>, vector<1x128xf32> -> vector<2x128xf32>
    %57 = vector.broadcast %23 : vector<1x128xf32> to vector<2x128xf32>
    %58 = arith.mulf %56, %57 : vector<2x128xf32>
    %cst_11 = arith.constant dense<0.000000e+00> : vector<2xf32>
    %59 = vector.multi_reduction <add>, %58, %cst_11 [1] : vector<2x128xf32> to vector<2xf32>
    %60 = vector.shape_cast %59 : vector<2xf32> to vector<2x1xf32>
    %c0_12 = arith.constant 0 : index
    %c0_13 = arith.constant 0 : index
    %61 = vector.load %arg2[%c0_12, %c0_13] : memref<2x128xf32, #tpu.memory_space<vmem>>, vector<2x128xf32>
    %62 = vector.broadcast %24 : vector<1x128xf32> to vector<2x128xf32>
    %63 = arith.mulf %61, %62 : vector<2x128xf32>
    %cst_14 = arith.constant dense<0.000000e+00> : vector<2xf32>
    %64 = vector.multi_reduction <add>, %63, %cst_14 [1] : vector<2x128xf32> to vector<2xf32>
    %65 = vector.shape_cast %64 : vector<2xf32> to vector<2x1xf32>
    %66 = arith.addf %60, %65 : vector<2x1xf32>
    %c0_15 = arith.constant 0 : index
    %c0_16 = arith.constant 0 : index
    %67 = vector.load %arg5[%c0_15, %c0_16] : memref<2x1xf32, #tpu.memory_space<vmem>>, vector<2x1xf32>
    tpu.vector_store %arg5[%c0_15, %c0_16], %66 {strides = array<i32>} : memref<2x1xf32, #tpu.memory_space<vmem>>, vector<2x1xf32>,
    return
  }
  func.func @transform_0(%arg0: i32) -> (i32, i32) {
    %c0_i32 = arith.constant 0 : i32
    %c0_i32_0 = arith.constant 0 : i32
    return %arg0, %c0_i32 : i32, i32
  }
  func.func @transform_1(%arg0: i32) -> (i32, i32) {
    %c0_i32 = arith.constant 0 : i32
    %c0_i32_0 = arith.constant 0 : i32
    return %arg0, %c0_i32 : i32, i32
  }
  func.func @transform_2(%arg0: i32) -> (i32, i32) {
    %c0_i32 = arith.constant 0 : i32
    %c0_i32_0 = arith.constant 0 : i32
    %c0_i32_1 = arith.constant 0 : i32
    return %c0_i32, %c0_i32_0 : i32, i32
  }
  func.func @transform_3(%arg0: i32) -> (i32, i32) {
    %c0_i32 = arith.constant 0 : i32
    %c0_i32_0 = arith.constant 0 : i32
    %c0_i32_1 = arith.constant 0 : i32
    return %c0_i32, %c0_i32_0 : i32, i32
  }
  func.func @transform_4(%arg0: i32) -> (i32, i32) {
    %c0_i32 = arith.constant 0 : i32
    %c0_i32_0 = arith.constant 0 : i32
    return %arg0, %c0_i32 : i32, i32
  }
}

</mosaic_0001>

<llo_original>
// kernel: tpu_custom_call.1
$region0: #{tpu_custom_call.1}
  #allocation0 [shape = 'u32[]', space=smem, size = 0x4, offset = 0x4, fixed_abs, tag = 'smem constant byte address 0x4 - core index']
  #allocation1 [shape = 'u32[144,128]{1,0:T(1,128)}', space=vmem, size = 0x12000, scoped, tag = 'internal scratch']
  %s0 = inlined_call_operand.vmem [shape: s32[16,1], index: 0, kind: input, shape index: {}]
  %s1 = inlined_call_operand.vmem [shape: f32[2,128], index: 1, kind: input, shape index: {}]
  %s2 = inlined_call_operand.hbm [shape: bf16[50,640], index: 2, kind: input, shape index: {}]
  %s3 = inlined_call_operand.vmem [shape: f32[8,128], index: 3, kind: input, shape index: {}]
  %s4 = inlined_call_operand.vmem [shape: f32[2,1], index: 4, kind: output, shape index: {}]
  %s5 = sld [smem:[#allocation0]]
  $region30: #{tpu_custom_call.1} parent=0
    _
  %s7 = ssub.s32 1, %s5
  %s8 = scalar_select 0, %s7, %s5
  $region1: #{tpu_custom_call.1} parent=0
    #allocation2 [shape = 'u8[71680]{0}', space=vmem, size = 0x11800, scoped, tag = 'input window, operand 2, single buffered']
    #allocation3 [shape = 's32[1]{0}', space=sflag, size = 0x4, scoped, tag = 'scoped memory for tpu_custom_call.1']
    %9 = vsyncpa [#allocation3], 0
    // Predicated region
    $region2: #{tpu_custom_call.1} parent=1 // pred_check
      _
    $region3: #{tpu_custom_call.1} parent=1 // pred_check_branch
      %11 = sbr.rel (0) target = $region5
    $region4: #{tpu_custom_call.1} parent=1 // pred_region
      _
    $region5: #{tpu_custom_call.1} parent=1 // pred_fallthru
      _
    // Predicated region
    $region6: #{tpu_custom_call.1} parent=1 // pred_check
      _
    $region7: #{tpu_custom_call.1} parent=1 // pred_check_branch
      %13 = sbr.rel (0) target = $region9
    $region8: #{tpu_custom_call.1} parent=1 // pred_region
      _
    $region9: #{tpu_custom_call.1} parent=1 // pred_fallthru
      _
    // Predicated region
    $region10: #{tpu_custom_call.1} parent=1 // pred_check
      _
    $region11: #{tpu_custom_call.1} parent=1 // pred_check_branch
      %15 = sbr.rel (0) target = $region13
    $region12: #{tpu_custom_call.1} parent=1 // pred_region
      %s17 = ssub.s32 2240, 2240
      %18 = vsyncadd [#allocation3], %s17
      %s19 = sshll.u32 [#allocation2], 4
      %s20 = int_to_ptr.vmem [resolvable:$true] %s19
      %25 = dma.hbm_to_vmem [thread:$0]  %s2, 2240, %s20, [#allocation3], 320, 320, 20
    $region13: #{tpu_custom_call.1} parent=1 // pred_fallthru
      _
    // Predicated region
    $region14: #{tpu_custom_call.1} parent=1 // pred_check
      _
    $region15: #{tpu_custom_call.1} parent=1 // pred_check_branch
      %27 = sbr.rel (0) target = $region17
    $region16: #{tpu_custom_call.1} parent=1 // pred_region
      _
    $region17: #{tpu_custom_call.1} parent=1 // pred_fallthru
      _
    // Predicated region
    $region18: #{tpu_custom_call.1} parent=1 // pred_check
      _
    $region19: #{tpu_custom_call.1} parent=1 // pred_check_branch
      %29 = sbr.rel (0) target = $region21
    $region20: #{tpu_custom_call.1} parent=1 // pred_region
      %30 = dma.done [#allocation3], 2240
    $region21: #{tpu_custom_call.1} parent=1 // pred_fallthru
      _
    %v32 = vld [vmem:[%s0] sm:$0xff]
    %v33 = vld [vmem:[%s0 + $0x8] sm:$0xff]
    %v34 = vlaneseq
    %v35 = vand.u32 %v34, 127
    %36 = vset.pattern.permute.xlu0 0
    %37 = vperm.xlu0 %36, %v32
    %v38 = vpop.permute.xlu0 %37
    %39 = vset.pattern.permute.xlu0 0
    %40 = vperm.xlu0 %39, %v33
    %v41 = vpop.permute.xlu0 %40
    %vm42 = vcmp.eq.s32.totalorder %v35, %v38
    %vm43 = vcmp.eq.s32.totalorder %v35, %v41
    %v44 = vsel %vm42, 1, 0
    %v45 = vsel %vm43, 1, 0
    %v46 = vcvt.s32.f32 %v44
    %v47 = vcvt.s32.f32 %v45
    %v48 = vpack.c.bf16 %v47, %v46
    %v49 = vld [vmem:[#allocation2] sm:$0xff]
    %v50 = vld [vmem:[#allocation2 + $0x8] sm:$0xff]
    %v51 = vld [vmem:[#allocation2 + $0x10] sm:$0xf]
    %v52 = vld [vmem:[#allocation2 + $0x14] sm:$0xff]
    %v53 = vld [vmem:[#allocation2 + $0x1c] sm:$0xff]
    %v54 = vld [vmem:[#allocation2 + $0x24] sm:$0xf]
    %v55 = vld [vmem:[#allocation2 + $0x28] sm:$0xff]
    %v56 = vld [vmem:[#allocation2 + $0x30] sm:$0xff]
    %v57 = vld [vmem:[#allocation2 + $0x38] sm:$0xf]
    %v58 = vld [vmem:[#allocation2 + $0x3c] sm:$0xff]
    %v59 = vld [vmem:[#allocation2 + $0x44] sm:$0xff]
    %v60 = vld [vmem:[#allocation2 + $0x4c] sm:$0xf]
    %v61 = vld [vmem:[#allocation2 + $0x50] sm:$0xff]
    %v62 = vld [vmem:[#allocation2 + $0x58] sm:$0xff]
    %v63 = vld [vmem:[#allocation2 + $0x60] sm:$0xf]
    %v64 = vld [vmem:[#allocation2 + $0x64] sm:$0xff]
    %v65 = vld [vmem:[#allocation2 + $0x6c] sm:$0xff]
    %v66 = vld [vmem:[#allocation2 + $0x74] sm:$0xf]
    %v67 = vld [vmem:[#allocation2 + $0x78] sm:$0x11]
    %v68 = vld [vmem:[#allocation2 + $0x80] sm:$0x11]
    %v69 = vld [vmem:[#allocation2 + $0x88] sm:$0x1]
    %v91 = vunpack.c.l.b16 %v49
    %v92 = vunpack.c.h.b16 %v49
    %v93 = vunpack.c.l.b16 %v50
    %v94 = vunpack.c.h.b16 %v50
    %v95 = vunpack.c.l.b16 %v51
    %v96 = vunpack.c.l.b16 %v52
    %v97 = vunpack.c.h.b16 %v52
    %v98 = vunpack.c.l.b16 %v53
    %v99 = vunpack.c.h.b16 %v53
    %v100 = vunpack.c.l.b16 %v54
    %v101 = vunpack.c.l.b16 %v55
    %v102 = vunpack.c.h.b16 %v55
    %v103 = vunpack.c.l.b16 %v56
    %v104 = vunpack.c.h.b16 %v56
    %v105 = vunpack.c.l.b16 %v57
    %v106 = vunpack.c.l.b16 %v58
    %v107 = vunpack.c.h.b16 %v58
    %v108 = vunpack.c.l.b16 %v59
    %v109 = vunpack.c.h.b16 %v59
    %v110 = vunpack.c.l.b16 %v60
    %v111 = vunpack.c.l.b16 %v61
    %v112 = vunpack.c.h.b16 %v61
    %v113 = vunpack.c.l.b16 %v62
    %v114 = vunpack.c.h.b16 %v62
    %v115 = vunpack.c.l.b16 %v63
    %v116 = vunpack.c.l.b16 %v64
    %v117 = vunpack.c.h.b16 %v64
    %v118 = vunpack.c.l.b16 %v65
    %v119 = vunpack.c.h.b16 %v65
    %v120 = vunpack.c.l.b16 %v66
    %v121 = vunpack.c.l.b16 %v67
    %v122 = vunpack.c.h.b16 %v67
    %v123 = vunpack.c.l.b16 %v68
    %v124 = vunpack.c.h.b16 %v68
    %v125 = vunpack.c.l.b16 %v69
    %v126 = vpack.c.b16 %v96, %v91
    %v127 = vpack.c.b16 %v97, %v92
    %v128 = vpack.c.b16 %v98, %v93
    %v129 = vpack.c.b16 %v99, %v94
    %v130 = vpack.c.b16 %v100, %v95
    %v131 = vpack.c.b16 %v106, %v101
    %v132 = vpack.c.b16 %v107, %v102
    %v133 = vpack.c.b16 %v108, %v103
    %v134 = vpack.c.b16 %v109, %v104
    %v135 = vpack.c.b16 %v110, %v105
    %v136 = vpack.c.b16 %v116, %v111
    %v137 = vpack.c.b16 %v117, %v112
    %v138 = vpack.c.b16 %v118, %v113
    %v139 = vpack.c.b16 %v119, %v114
    %v140 = vpack.c.b16 %v120, %v115
    %v141 = vpack.c.b16 %v121, %v121
    %v142 = vpack.c.b16 %v122, %v122
    %v143 = vpack.c.b16 %v123, %v123
    %v144 = vpack.c.b16 %v124, %v124
    %v145 = vpack.c.b16 %v125, %v125
    %vm161 = vcmask 408576
    %v163 = vsel %vm161, %v48, 0
    %vm165 = vcmask 1040384
    %v167 = vsel %vm165, %v141, 0
    %v170 = vsel %vm165, %v142, 0
    %v173 = vsel %vm165, %v143, 0
    %v176 = vsel %vm165, %v144, 0
    %v179 = vsel %vm165, %v145, 0
    %181 = vmatprep.subr.bf16.mxu0 %v127
    %182 = vmatpush1.bf16.msra.mxu0 %v126
    %183 = vmatprep.subr.bf16.mxu0 %v132
    %184 = vmatpush1.bf16.msra.mxu0 %v131
    %185 = vmatprep.subr.bf16.mxu0 %v137
    %186 = vmatpush1.bf16.msra.mxu0 %v136
    %187 = vmatprep.subr.bf16.mxu0 %v170
    %188 = vmatpush1.bf16.msra.mxu0 %v167
    %189 = vmatprep.subr.bf16.mxu0 0
    %190 = vmatpush1.bf16.msra.mxu0 0
    %191 = vmatprep.subr.bf16.mxu0 0
    %192 = vmatpush1.bf16.msra.mxu0 0
    %193 = vmatprep.subr.bf16.mxu0 0
    %194 = vmatpush1.bf16.msra.mxu0 0
    %195 = vmatprep.subr.bf16.mxu0 0
    %196 = vmatpush1.bf16.msra.mxu0 0
    %197 = vmatprep.subr.bf16.mxu0 0
    %198 = vmatpush1.bf16.msra.mxu0 0
    %199 = vmatprep.subr.bf16.mxu0 0
    %200 = vmatpush1.bf16.msra.mxu0 0
    %201 = vmatprep.subr.bf16.mxu0 0
    %202 = vmatpush1.bf16.msra.mxu0 0
    %203 = vmatprep.subr.bf16.mxu0 0
    %204 = vmatpush1.bf16.msra.mxu0 0
    %205 = vmatprep.subr.bf16.mxu0 0
    %206 = vmatpush1.bf16.msra.mxu0 0
    %207 = vmatprep.subr.bf16.mxu0 0
    %208 = vmatpush1.bf16.msra.mxu0 0
    %209 = vmatprep.subr.bf16.mxu0 0
    %210 = vmatpush1.bf16.msra.mxu0 0
    %211 = vmatprep.subr.bf16.mxu0 0
    %212 = vmatpush1.bf16.msra.mxu0 0
    %213 = vmatprep.mubr.bf16.mxu0 0
    %214 = vmatmul.mubr.bf16.gmra.mrb[0].mxu0 %v163
    %v215 = vpop.f32.mrb[0].mxu0
    %v216 = vadd.f32 0.0, %v215
    %v217 = vpop.f32.mrb[0].mxu0
    %v218 = vadd.f32 0.0, %v217
    %v219 = vpop.f32.mrb[0].mxu0
    %v220 = vadd.f32 0.0, %v219
    %v221 = vpop.f32.mrb[0].mxu0
    %v222 = vadd.f32 0.0, %v221
    %223 = vdwg.mxu0
    %224 = vmatprep.subr.bf16.mxu0 %v129
    %225 = vmatpush1.bf16.msra.mxu0 %v128
    %226 = vmatprep.subr.bf16.mxu0 %v134
    %227 = vmatpush1.bf16.msra.mxu0 %v133
    %228 = vmatprep.subr.bf16.mxu0 %v139
    %229 = vmatpush1.bf16.msra.mxu0 %v138
    %230 = vmatprep.subr.bf16.mxu0 %v176
    %231 = vmatpush1.bf16.msra.mxu0 %v173
    %232 = vmatprep.subr.bf16.mxu0 0
    %233 = vmatpush1.bf16.msra.mxu0 0
    %234 = vmatprep.subr.bf16.mxu0 0
    %235 = vmatpush1.bf16.msra.mxu0 0
    %236 = vmatprep.subr.bf16.mxu0 0
    %237 = vmatpush1.bf16.msra.mxu0 0
    %238 = vmatprep.subr.bf16.mxu0 0
    %239 = vmatpush1.bf16.msra.mxu0 0
    %240 = vmatprep.subr.bf16.mxu0 0
    %241 = vmatpush1.bf16.msra.mxu0 0
    %242 = vmatprep.subr.bf16.mxu0 0
    %243 = vmatpush1.bf16.msra.mxu0 0
    %244 = vmatprep.subr.bf16.mxu0 0
    %245 = vmatpush1.bf16.msra.mxu0 0
    %246 = vmatprep.subr.bf16.mxu0 0
    %247 = vmatpush1.bf16.msra.mxu0 0
    %248 = vmatprep.subr.bf16.mxu0 0
    %249 = vmatpush1.bf16.msra.mxu0 0
    %250 = vmatprep.subr.bf16.mxu0 0
    %251 = vmatpush1.bf16.msra.mxu0 0
    %252 = vmatprep.subr.bf16.mxu0 0
    %253 = vmatpush1.bf16.msra.mxu0 0
    %254 = vmatprep.subr.bf16.mxu0 0
    %255 = vmatpush1.bf16.msra.mxu0 0
    %256 = vmatprep.mubr.bf16.mxu0 0
    %257 = vmatmul.mubr.bf16.gmra.mrb[0].mxu0 %v163
    %v258 = vpop.f32.mrb[0].mxu0
    %v259 = vadd.f32 0.0, %v258
    %v260 = vpop.f32.mrb[0].mxu0
    %v261 = vadd.f32 0.0, %v260
    %v262 = vpop.f32.mrb[0].mxu0
    %v263 = vadd.f32 0.0, %v262
    %v264 = vpop.f32.mrb[0].mxu0
    %v265 = vadd.f32 0.0, %v264
    %266 = vdwg.mxu0
    %267 = vmatprep.subr.bf16.mxu0 0
    %268 = vmatpush1.bf16.msra.mxu0 %v130
    %269 = vmatprep.subr.bf16.mxu0 0
    %270 = vmatpush1.bf16.msra.mxu0 %v135
    %271 = vmatprep.subr.bf16.mxu0 0
    %272 = vmatpush1.bf16.msra.mxu0 %v140
    %273 = vmatprep.subr.bf16.mxu0 0
    %274 = vmatpush1.bf16.msra.mxu0 %v179
    %275 = vmatprep.subr.bf16.mxu0 0
    %276 = vmatpush1.bf16.msra.mxu0 0
    %277 = vmatprep.subr.bf16.mxu0 0
    %278 = vmatpush1.bf16.msra.mxu0 0
    %279 = vmatprep.subr.bf16.mxu0 0
    %280 = vmatpush1.bf16.msra.mxu0 0
    %281 = vmatprep.subr.bf16.mxu0 0
    %282 = vmatpush1.bf16.msra.mxu0 0
    %283 = vmatprep.subr.bf16.mxu0 0
    %284 = vmatpush1.bf16.msra.mxu0 0
    %285 = vmatprep.subr.bf16.mxu0 0
    %286 = vmatpush1.bf16.msra.mxu0 0
    %287 = vmatprep.subr.bf16.mxu0 0
    %288 = vmatpush1.bf16.msra.mxu0 0
    %289 = vmatprep.subr.bf16.mxu0 0
    %290 = vmatpush1.bf16.msra.mxu0 0
    %291 = vmatprep.subr.bf16.mxu0 0
    %292 = vmatpush1.bf16.msra.mxu0 0
    %293 = vmatprep.subr.bf16.mxu0 0
    %294 = vmatpush1.bf16.msra.mxu0 0
    %295 = vmatprep.subr.bf16.mxu0 0
    %296 = vmatpush1.bf16.msra.mxu0 0
    %297 = vmatprep.subr.bf16.mxu0 0
    %298 = vmatpush1.bf16.msra.mxu0 0
    %299 = vmatprep.mubr.bf16.mxu0 0
    %300 = vmatmul.mubr.bf16.gmra.mrb[0].mxu0 %v163
    %v301 = vpop.f32.mrb[0].mxu0
    %v302 = vadd.f32 0.0, %v301
    %v303 = vpop.f32.mrb[0].mxu0
    %v304 = vpop.f32.mrb[0].mxu0
    %v305 = vadd.f32 0.0, %v304
    %v306 = vpop.f32.mrb[0].mxu0
    %307 = vdwg.mxu0
    %v308 = vrot.slane %v218, 1
    %v309 = vrot.slane %v222, 1
    %v310 = vlaneseq
    %v311 = vshrl.u32 %v310, 7
    %vm312 = vcmp.lt.s32.totalorder %v311, 7
    %v313 = vsel %vm312, %v308, %v309
    %v314 = vsel %vm312, %v309, %v308
    %v315 = vadd.f32 %v216, %v313
    %v316 = vadd.f32 %v220, %v314
    %v317 = vrot.slane %v259, 2
    %v318 = vrot.slane %v263, 2
    %vm319 = vcmp.lt.s32.totalorder %v311, 6
    %v320 = vsel %vm319, %v317, %v318
    %v321 = vsel %vm319, %v318, %v317
    %v322 = vadd.f32 %v315, %v320
    %v323 = vadd.f32 %v316, %v321
    %v324 = vrot.slane %v261, 3
    %v325 = vrot.slane %v265, 3
    %vm326 = vcmp.lt.s32.totalorder %v311, 5
    %v327 = vsel %vm326, %v324, %v325
    %v328 = vsel %vm326, %v325, %v324
    %v329 = vadd.f32 %v322, %v327
    %v330 = vadd.f32 %v323, %v328
    %v331 = vrot.slane %v302, 4
    %v332 = vrot.slane %v305, 4
    %vm333 = vcmp.lt.s32.totalorder %v311, 4
    %v334 = vsel %vm333, %v331, %v332
    %v335 = vsel %vm333, %v332, %v331
    %v336 = vadd.f32 %v329, %v334
    %v337 = vadd.f32 %v330, %v335
    %v338 = vld [vmem:[%s3] sm:$0x1]
    %v339 = vld [vmem:[%s3 + $0x1] sm:$0x1]
    %v340 = vld [vmem:[%s3 + $0x2] sm:$0x1]
    %v341 = vlaneseq
    %v342 = vshrl.u32 %v341, 7
    %v343 = vsub.s32 0, %v342
    %v344 = vrot.slane %v338, %v343
    %v345 = vadd.f32 %v336, %v344
    %v346 = vadd.f32 %v337, %v344
    %v347 = vadd.s32 %v311, 8
    %v348 = vand.u32 %v311, 7
    %v349 = vand.u32 %v347, 7
    %vm350 = vcmp.lt.s32.totalorder %v35, 10
    %vm351 = vcmp.lt.s32.totalorder %v35, 20
    %vm352 = vcmp.lt.s32.totalorder %v35, 30
    %v353 = vsel %vm352, 3, 4294967295
    %v354 = vsel %vm351, 4, %v353
    %v355 = vsel %vm350, 5, %v354
    %vm356 = vcmp.le.s32.totalorder %v348, %v355
    %vm357 = vcmp.le.s32.totalorder %v349, %v355
    %vm358 = vcmp.gt.f32.partialorder %v345, 0.0
    %vm359 = vcmp.gt.f32.partialorder %v346, 0.0
    %vm360 = vmand %vm356, %vm358
    %vm361 = vmand %vm357, %vm359
    %v362 = vsel %vm360, %v345, 0.0
    %v363 = vsel %vm361, %v346, 0.0
    %v364 = vrot.slane %v362, 4
    %v365 = vmax.f32 %v362, %v364
    %v366 = vrot.slane %v365, 2
    %v367 = vmax.f32 %v365, %v366
    %v368 = vrot.slane %v367, 1
    %v369 = vmax.f32 %v367, %v368
    %v370 = vrot.slane %v363, 4
    %v371 = vmax.f32 %v363, %v370
    %v372 = vrot.slane %v371, 2
    %v373 = vmax.f32 %v371, %v372
    %v374 = vrot.slane %v373, 1
    %v375 = vmax.f32 %v373, %v374
    %v376 = vsel %vm165, %v369, %v375
    %v377 = vlaneseq
    %v378 = vshrl.u32 %v377, 7
    %v379 = vsub.s32 0, %v378
    %v380 = vrot.slane %v339, %v379
    %v381 = vmul.f32 %v376, %v380
    %vm382 = vcmask 1041408
    %v383 = vsel %vm382, %v381, 0.0
    %384 = vadd.xlane.f32.xlu0 %v383
    %v385 = vpop.xlane.xlu0 %384
    %v386 = vld [vmem:[%s1] sm:$0x3]
    %v387 = vlaneseq
    %v388 = vshrl.u32 %v387, 7
    %v389 = vsub.s32 0, %v388
    %v390 = vrot.slane %v340, %v389
    %v391 = vmul.f32 %v386, %v390
    %v392 = vsel %vm382, %v391, 0.0
    %393 = vadd.xlane.f32.xlu0 %v392
    %v394 = vpop.xlane.xlu0 %393
    %v395 = vadd.f32 %v385, %v394
    %vm396 = vcmask 1024
    %397 = vst.msk [vmem:[%s4] sm:$0x3] %vm396, %v395
    // Predicated region
    $region22: #{tpu_custom_call.1} parent=1 // pred_check
      _
    $region23: #{tpu_custom_call.1} parent=1 // pred_check_branch
      %399 = sbr.rel (0) target = $region25
    $region24: #{tpu_custom_call.1} parent=1 // pred_region
      _
    $region25: #{tpu_custom_call.1} parent=1 // pred_fallthru
      _
    // Predicated region
    $region26: #{tpu_custom_call.1} parent=1 // pred_check
      _
    $region27: #{tpu_custom_call.1} parent=1 // pred_check_branch
      %401 = sbr.rel (0) target = $region29
    $region28: #{tpu_custom_call.1} parent=1 // pred_region
      _
    $region29: #{tpu_custom_call.1} parent=1 // pred_fallthru
      _
    %402 = vsyncpa [#allocation3], 1

</llo_original>
